<compile_context>
chip_gen: v7x
topology: tpu7x:2x2x1
jax: 0.10.0
libtpu: 0.0.40
codegen_flags: <defaults>
</compile_context>

<pallas_src>
import jax
import jax.numpy as jnp
from jax import lax
from jax.experimental import pallas as pl
from jax.experimental.pallas import tpu as pltpu


def _make_channel_atten_kernel(eps: float):
    # eps is a Python float -> baked in as a literal, not a captured tracer.
    def kernel(p_ref, w_ref, pk_ref, x_ref, o_ref):
        # p_ref : (Bt, 1, Cin)   instance params (f32) for this batch tile
        # w_ref : (C, Cin)       nn.Linear weight (f32, native [out, in])
        # pk_ref: (3, C, 1)      packed [lin_bias, ln_weight, ln_bias] (f32)
        # x_ref : (Bt, C, HWT)   global features, native dtype
        # o_ref : (Bt, C, HWT)   output, native dtype
        p = p_ref[...]                                     # (Bt, 1, Cin) f32
        w = w_ref[...]                                     # (C, Cin)     f32

        # Linear: z[b, c] = sum_i W[c, i] * p[b, i] + bias[c]
        # VPU broadcast-multiply + lane reduce -> column (Bt, C, 1).
        z = jnp.sum(p * w, axis=-1, keepdims=True) + pk_ref[0]

        # LayerNorm over the C output features (biased variance, eps in rsqrt).
        mu = jnp.mean(z, axis=1, keepdims=True)            # (Bt, 1, 1)
        d = z - mu
        var = jnp.mean(d * d, axis=1, keepdims=True)       # (Bt, 1, 1)
        scale = d * lax.rsqrt(var + eps) * pk_ref[1] + pk_ref[2]   # (Bt, C, 1)

        # Broadcast multiply along the HW lane axis. Upcast the tile in vregs
        # (identity for f32 inputs; safe bf16 path on v5e) and cast back.
        x = x_ref[...].astype(jnp.float32)
        o_ref[...] = (x * scale).astype(o_ref.dtype)

    return kernel


def _choose_blocks(B, C, HW, itemsize, target_bytes=2 << 20):
    """Pick (batch_tile, hw_tile) so each grid step moves ~target_bytes."""
    elem_bytes = C * HW * itemsize
    if elem_bytes >= target_bytes:
        bt, hwt = 1, HW
        # Very large single elements: tile HW (multiples of 128) to bound VMEM.
        if elem_bytes > (8 << 20) and HW % 128 == 0:
            t = 128
            while t < HW:
                if HW % t == 0 and C * t * itemsize >= target_bytes:
                    hwt = t
                    break
                t += 128
        return bt, hwt
    # Small per-element blocks: fold several batch elements into one step.
    bt = max(1, min(B, target_bytes // elem_bytes))
    if B >= 2:
        bt = max(1, min(bt, B // 2))     # keep >= 2 grid steps for v7x megacore
    while B % bt:                        # round down to a divisor of B
        bt -= 1
    return bt, HW


def channel_atten_forward(global_features, instance_params,
                          lin_weight, lin_bias, ln_weight, ln_bias,
                          eps=1e-5):
    """global_features: [B, C, H, W]; instance_params: [B, Cin];
    lin_weight: [C, Cin] (nn.Linear layout); lin_bias/ln_weight/ln_bias: [C].
    Returns ch_atn: [B, C, H, W] in global_features.dtype."""
    B, C, H, W = global_features.shape
    Cin = instance_params.shape[1]
    HW = H * W
    feat_dtype = global_features.dtype
    itemsize = jnp.dtype(feat_dtype).itemsize

    bt, hwt = _choose_blocks(B, C, HW, itemsize)
    grid = (B // bt, HW // hwt)

    # Big tensor: reshape only (free), NO dtype change -> no extra HBM pass.
    feats = global_features.reshape(B, C, HW)
    # Tiny tensors: f32 is fine (negligible bytes).
    params = instance_params.reshape(B, 1, Cin).astype(jnp.float32)
    w = lin_weight.astype(jnp.float32)                                 # (C, Cin)
    packed = jnp.stack(
        [lin_bias.astype(jnp.float32).reshape(C, 1),
         ln_weight.astype(jnp.float32).reshape(C, 1),
         ln_bias.astype(jnp.float32).reshape(C, 1)], axis=0)           # (3, C, 1)

    blk_bytes = bt * C * hwt * itemsize
    vmem_limit = int(min(64 << 20, max(32 << 20, 4 * blk_bytes + (2 << 20))))

    out = pl.pallas_call(
        _make_channel_atten_kernel(float(eps)),
        out_shape=jax.ShapeDtypeStruct((B, C, HW), feat_dtype),
        grid=grid,
        in_specs=[
            pl.BlockSpec((bt, 1, Cin), lambda b, h: (b, 0, 0)),   # instance params
            pl.BlockSpec((C, Cin), lambda b, h: (0, 0)),          # linear weight
            pl.BlockSpec((3, C, 1), lambda b, h: (0, 0, 0)),      # packed bias/gamma/beta
            pl.BlockSpec((bt, C, hwt), lambda b, h: (b, 0, h)),   # features
        ],
        out_specs=pl.BlockSpec((bt, C, hwt), lambda b, h: (b, 0, h)),
        compiler_params=pltpu.CompilerParams(
            dimension_semantics=("parallel", "arbitrary"),
            vmem_limit_bytes=vmem_limit),
    )(params, w, packed, feats)

    return out.reshape(B, C, H, W)


if __name__ == "__main__":
    B, Cin, C, H, W = 2, 48, 32, 16, 16

    key = jax.random.PRNGKey(0)
    k1, k2, k3, k4, k5, k6 = jax.random.split(key, 6)
    global_features = jax.random.normal(k1, (B, C, H, W), dtype=jnp.float32)
    instance_params = jax.random.normal(k2, (B, Cin), dtype=jnp.float32)
    lin_weight = 0.1 * jax.random.normal(k3, (C, Cin), dtype=jnp.float32)
    lin_bias = 0.1 * jax.random.normal(k4, (C,), dtype=jnp.float32)
    ln_weight = 1.0 + 0.1 * jax.random.normal(k5, (C,), dtype=jnp.float32)
    ln_bias = 0.1 * jax.random.normal(k6, (C,), dtype=jnp.float32)

    out = channel_atten_forward(global_features, instance_params,
                                lin_weight, lin_bias, ln_weight, ln_bias)
    out = jax.block_until_ready(out)

    # Pure-JAX reference (mirrors the PyTorch module).
    z = instance_params @ lin_weight.T + lin_bias                  # [B, C]
    mu = z.mean(-1, keepdims=True)
    var = ((z - mu) ** 2).mean(-1, keepdims=True)
    scale = (z - mu) / jnp.sqrt(var + 1e-5) * ln_weight + ln_bias  # [B, C]
    ref = global_features * scale[:, :, None, None]

    assert out.shape == (B, C, H, W)
    assert out.dtype == global_features.dtype
    assert jnp.allclose(out, ref, rtol=1e-4, atol=1e-4)
    print("KERNEL_OK")
</pallas_src>

<mosaic_0001>
module attributes {stable_mosaic.version = 11 : i64} {
  func.func @kernel(%arg0: i32, %arg1: i32, %arg2: memref<1x1x48xf32, #tpu.memory_space<vmem>>, %arg3: memref<32x48xf32, #tpu.memory_space<vmem>>, %arg4: memref<3x32x1xf32, #tpu.memory_space<vmem>>, %arg5: memref<1x32x256xf32, #tpu.memory_space<vmem>>, %arg6: memref<1x32x256xf32, #tpu.memory_space<vmem>>) attributes {dimension_semantics = [#tpu.dimension_semantics<parallel>, #tpu.dimension_semantics<arbitrary>], iteration_bounds = array<i64: 2, 1>, scalar_prefetch = 0 : i64, scratch_operands = 0 : i64, tpu.core_type = #tpu.core_type<tc>, window_params = [{transform_indices = @transform_0, window_bounds = array<i64: 1, 1, 48>}, {pipeline_mode = #tpu.pipeline_mode<synchronous>, transform_indices = @transform_1, window_bounds = array<i64: 32, 48>}, {pipeline_mode = #tpu.pipeline_mode<synchronous>, transform_indices = @transform_2, window_bounds = array<i64: 3, 32, 1>}, {transform_indices = @transform_3, window_bounds = array<i64: 1, 32, 256>}, {transform_indices = @transform_4, window_bounds = array<i64: 1, 32, 256>}]} {
    %c0 = arith.constant 0 : index
    %c0_0 = arith.constant 0 : index
    %c0_1 = arith.constant 0 : index
    %0 = vector.load %arg2[%c0, %c0_0, %c0_1] : memref<1x1x48xf32, #tpu.memory_space<vmem>>, vector<1x1x48xf32>
    %c0_2 = arith.constant 0 : index
    %c0_3 = arith.constant 0 : index
    %1 = vector.load %arg3[%c0_2, %c0_3] : memref<32x48xf32, #tpu.memory_space<vmem>>, vector<32x48xf32>
    %2 = vector.shape_cast %1 : vector<32x48xf32> to vector<1x32x48xf32>
    %3 = vector.broadcast %0 : vector<1x1x48xf32> to vector<1x32x48xf32>
    %4 = arith.mulf %3, %2 : vector<1x32x48xf32>
    %cst = arith.constant dense<0.000000e+00> : vector<1x32xf32>
    %5 = vector.multi_reduction <add>, %4, %cst [2] : vector<1x32x48xf32> to vector<1x32xf32>
    %6 = vector.shape_cast %5 : vector<1x32xf32> to vector<1x32x1xf32>
    %c0_4 = arith.constant 0 : index
    %c0_5 = arith.constant 0 : index
    %c0_6 = arith.constant 0 : index
    %7 = vector.load %arg4[%c0_4, %c0_5, %c0_6] : memref<3x32x1xf32, #tpu.memory_space<vmem>>, vector<1x32x1xf32>
    %8 = vector.shape_cast %7 : vector<1x32x1xf32> to vector<32x1xf32>
    %9 = vector.shape_cast %8 : vector<32x1xf32> to vector<1x32x1xf32>
    %10 = arith.addf %6, %9 : vector<1x32x1xf32>
    %cst_7 = arith.constant dense<0.000000e+00> : vector<1x1xf32>
    %11 = vector.multi_reduction <add>, %10, %cst_7 [1] : vector<1x32x1xf32> to vector<1x1xf32>
    %12 = vector.shape_cast %11 : vector<1x1xf32> to vector<1x1x1xf32>
    %cst_8 = arith.constant 3.200000e+01 : f32
    %13 = vector.broadcast %cst_8 : f32 to vector<1x1x1xf32>
    %14 = arith.divf %12, %13 : vector<1x1x1xf32>
    %15 = vector.broadcast %14 : vector<1x1x1xf32> to vector<1x32x1xf32>
    %16 = arith.subf %10, %15 : vector<1x32x1xf32>
    %17 = arith.mulf %16, %16 : vector<1x32x1xf32>
    %cst_9 = arith.constant dense<0.000000e+00> : vector<1x1xf32>
    %18 = vector.multi_reduction <add>, %17, %cst_9 [1] : vector<1x32x1xf32> to vector<1x1xf32>
    %19 = vector.shape_cast %18 : vector<1x1xf32> to vector<1x1x1xf32>
    %cst_10 = arith.constant 3.200000e+01 : f32
    %20 = vector.broadcast %cst_10 : f32 to vector<1x1x1xf32>
    %21 = arith.divf %19, %20 : vector<1x1x1xf32>
    %cst_11 = arith.constant 9.99999974E-6 : f32
    %22 = vector.broadcast %cst_11 : f32 to vector<1x1x1xf32>
    %23 = arith.addf %21, %22 : vector<1x1x1xf32>
    %24 = math.rsqrt %23 : vector<1x1x1xf32>
    %25 = vector.broadcast %24 : vector<1x1x1xf32> to vector<1x32x1xf32>
    %26 = arith.mulf %16, %25 : vector<1x32x1xf32>
    %c1 = arith.constant 1 : index
    %c0_12 = arith.constant 0 : index
    %c0_13 = arith.constant 0 : index
    %27 = vector.load %arg4[%c1, %c0_12, %c0_13] : memref<3x32x1xf32, #tpu.memory_space<vmem>>, vector<1x32x1xf32>
    %28 = vector.shape_cast %27 : vector<1x32x1xf32> to vector<32x1xf32>
    %29 = vector.shape_cast %28 : vector<32x1xf32> to vector<1x32x1xf32>
    %30 = arith.mulf %26, %29 : vector<1x32x1xf32>
    %c2 = arith.constant 2 : index
    %c0_14 = arith.constant 0 : index
    %c0_15 = arith.constant 0 : index
    %31 = vector.load %arg4[%c2, %c0_14, %c0_15] : memref<3x32x1xf32, #tpu.memory_space<vmem>>, vector<1x32x1xf32>
    %32 = vector.shape_cast %31 : vector<1x32x1xf32> to vector<32x1xf32>
    %33 = vector.shape_cast %32 : vector<32x1xf32> to vector<1x32x1xf32>
    %34 = arith.addf %30, %33 : vector<1x32x1xf32>
    %c0_16 = arith.constant 0 : index
    %c0_17 = arith.constant 0 : index
    %c0_18 = arith.constant 0 : index
    %35 = vector.load %arg5[%c0_16, %c0_17, %c0_18] : memref<1x32x256xf32, #tpu.memory_space<vmem>>, vector<1x32x256xf32>
    %36 = vector.broadcast %34 : vector<1x32x1xf32> to vector<1x32x256xf32>
    %37 = arith.mulf %35, %36 : vector<1x32x256xf32>
    %c0_19 = arith.constant 0 : index
    %c0_20 = arith.constant 0 : index
    %c0_21 = arith.constant 0 : index
    %38 = vector.load %arg6[%c0_19, %c0_20, %c0_21] : memref<1x32x256xf32, #tpu.memory_space<vmem>>, vector<1x32x256xf32>
    tpu.vector_store %arg6[%c0_19, %c0_20, %c0_21], %37 {strides = array<i32>} : memref<1x32x256xf32, #tpu.memory_space<vmem>>, vector<1x32x256xf32>,
    return
  }
  func.func @transform_0(%arg0: i32, %arg1: i32) -> (i32, i32, i32) {
    %c0_i32 = arith.constant 0 : i32
    %c0_i32_0 = arith.constant 0 : i32
    %c0_i32_1 = arith.constant 0 : i32
    return %arg0, %c0_i32, %c0_i32_0 : i32, i32, i32
  }
  func.func @transform_1(%arg0: i32, %arg1: i32) -> (i32, i32) {
    %c0_i32 = arith.constant 0 : i32
    %c0_i32_0 = arith.constant 0 : i32
    %c0_i32_1 = arith.constant 0 : i32
    return %c0_i32, %c0_i32_0 : i32, i32
  }
  func.func @transform_2(%arg0: i32, %arg1: i32) -> (i32, i32, i32) {
    %c0_i32 = arith.constant 0 : i32
    %c0_i32_0 = arith.constant 0 : i32
    %c0_i32_1 = arith.constant 0 : i32
    %c0_i32_2 = arith.constant 0 : i32
    return %c0_i32, %c0_i32_0, %c0_i32_1 : i32, i32, i32
  }
  func.func @transform_3(%arg0: i32, %arg1: i32) -> (i32, i32, i32) {
    %c0_i32 = arith.constant 0 : i32
    %c0_i32_0 = arith.constant 0 : i32
    return %arg0, %c0_i32, %arg1 : i32, i32, i32
  }
  func.func @transform_4(%arg0: i32, %arg1: i32) -> (i32, i32, i32) {
    %c0_i32 = arith.constant 0 : i32
    %c0_i32_0 = arith.constant 0 : i32
    return %arg0, %c0_i32, %arg1 : i32, i32, i32
  }
}

</mosaic_0001>

<llo_original>
// kernel: tpu_custom_call.1
$region0: #{tpu_custom_call.1}
  #allocation0 [shape = 'u32[]', space=smem, size = 0x4, offset = 0x4, fixed_abs, tag = 'smem constant byte address 0x4 - core index']
  #allocation1 [shape = 'u32[144,128]{1,0:T(1,128)}', space=vmem, size = 0x12000, scoped, tag = 'internal scratch']
  %s0 = inlined_call_operand.vmem [shape: f32[2,1,48], index: 0, kind: input, shape index: {}]
  %s1 = inlined_call_operand.vmem [shape: f32[32,48], index: 1, kind: input, shape index: {}]
  %s2 = inlined_call_operand.vmem [shape: f32[3,32,1], index: 2, kind: input, shape index: {}]
  %s3 = inlined_call_operand.hbm [shape: f32[2,32,256], index: 3, kind: input, shape index: {}]
  %s4 = inlined_call_operand.hbm [shape: f32[2,32,256], index: 4, kind: output, shape index: {}]
  %s5 = sld [smem:[#allocation0]]
  $region53: #{tpu_custom_call.1} parent=0
    _
  %s7 = ssub.s32 1, %s5
  %s8 = scalar_select 0, %s7, %s5
  $region1: #{tpu_custom_call.1} parent=0
    #allocation2 [shape = 'u8[65536]{0}', space=vmem, size = 0x10000, scoped, tag = 'input window, operand 3']
    #allocation3 [shape = 's32[2]{0}', space=sflag, size = 0x8, scoped, tag = 'scoped memory for tpu_custom_call.1']
    #allocation4 [shape = 's32[2]{0}', space=sflag, size = 0x8, scoped, tag = 'scoped memory for tpu_custom_call.1']
    #allocation5 [shape = 'u8[65536]{0}', space=vmem, size = 0x10000, scoped, tag = 'output window, operand 0']
    %9 = vsyncpa [#allocation3], 0
    %s10 = scalar_lea.sflag [#allocation3], 1
    %11 = vsyncpa %s10, 0
    %12 = vsyncpa [#allocation4], 0
    %s13 = scalar_lea.sflag [#allocation4], 1
    %14 = vsyncpa %s13, 0
    loop: start=0, step=1, limit=4
    $region2: #{tpu_custom_call.1} parent=1 // loop_pre_header
      _
    $region3: #{tpu_custom_call.1} parent=1 // loop_header
      %s16 = sphi 0, %s20
      %p17 = scmp.ge.s32.totalorder %s16, 4
      %s23 = sphi 0, %s35
      %s24 = sphi 0, %s31
      %s25 = sphi 0, %s23
      %s26 = sphi 0, %s24
      %s27 = sphi 0, %s25
      %s28 = sphi 0, %s26
      %s38 = sphi 0, %s40
      %s41 = sphi 0, %s38
      %s42 = sphi 0, %s41
      %s58 = sphi 0, %s42
      %s62 = sphi 0, %s62
      %s64 = sphi 0, %s62
      %s65 = sphi 0, %s64
      %s79 = sphi 0, %s65
      %s83 = sphi 0, %s83
      %s85 = sphi 0, %s83
      %s86 = sphi 0, %s85
      %s100 = sphi 0, %s86
      %s108 = sphi 0, %s110
      %s111 = sphi 0, %s108
      %s112 = sphi 0, %s111
      %s128 = sphi 0, %s112
      %s136 = sphi 0, %s138
      %s139 = sphi 0, %s136
      %s140 = sphi 0, %s139
      %s156 = sphi 0, %s140
    $region4: #{tpu_custom_call.1} parent=1 // loop_header_branch
      %19 = sbr.rel (%p17) target = $region8
    $region5: #{tpu_custom_call.1} parent=1 // loop_body
      %s21 = ssub.s32 %s16, 1
      %s22 = ssub.s32 %s16, 2
      %s29 = sadd.s32 1, %s24
      %p30 = scmp.ge.s32.totalorder %s29, 1
      %s31 = scalar_select %p30, 0, %s29
      %s32 = sadd.s32 1, %s23
      %s33 = scalar_select %p30, %s32, %s23
      %p34 = scmp.ge.s32.totalorder %s33, 2
      %s35 = scalar_select %p34, 0, %s33
      %s36 = ssub.s32 %s23, %s35
      %p37 = scmp.eq.s32.totalorder %s36, 0
      %s39 = sadd.s32 %s38, 1
      %s40 = scalar_select %p37, %s38, %s39
      %p43 = pneg %p37
      %p44 = scmp.eq.s32.totalorder %s16, 1
      %p45 = por %p43, %p44
      %p46 = scmp.ne.s32.totalorder %s38, %s41
      %p47 = scmp.eq.s32.totalorder %s16, 0
      %p48 = por %p46, %p47
      %p49 = scmp.ne.s32.totalorder %s38, %s41
      %p50 = scmp.eq.s32.totalorder %s21, 1
      %p51 = por %p49, %p50
      %p52 = scmp.ne.s32.totalorder %s41, %s42
      %p53 = scmp.eq.s32.totalorder %s21, 0
      %p54 = por %p52, %p53
      %p55 = scmp.ne.s32.totalorder %s41, %s42
      %p56 = scmp.eq.s32.totalorder %s22, 1
      %p57 = por %p55, %p56
      %p59 = scmp.ne.s32.totalorder %s42, %s58
      %p60 = scmp.eq.s32.totalorder %s22, 0
      %p61 = por %p59, %p60
      %s63 = sadd.s32 %s62, 1
      %p66 = scmp.eq.s32.totalorder %s16, 1
      %p67 = scmp.ne.s32.totalorder %s62, %s64
      %p68 = scmp.eq.s32.totalorder %s16, 0
      %p69 = por %p67, %p68
      %p70 = scmp.ne.s32.totalorder %s62, %s64
      %p71 = scmp.eq.s32.totalorder %s21, 1
      %p72 = por %p70, %p71
      %p73 = scmp.ne.s32.totalorder %s64, %s65
      %p74 = scmp.eq.s32.totalorder %s21, 0
      %p75 = por %p73, %p74
      %p76 = scmp.ne.s32.totalorder %s64, %s65
      %p77 = scmp.eq.s32.totalorder %s22, 1
      %p78 = por %p76, %p77
      %p80 = scmp.ne.s32.totalorder %s65, %s79
      %p81 = scmp.eq.s32.totalorder %s22, 0
      %p82 = por %p80, %p81
      %s84 = sadd.s32 %s83, 1
      %p87 = scmp.eq.s32.totalorder %s16, 1
      %p88 = scmp.ne.s32.totalorder %s83, %s85
      %p89 = scmp.eq.s32.totalorder %s16, 0
      %p90 = por %p88, %p89
      %p91 = scmp.ne.s32.totalorder %s83, %s85
      %p92 = scmp.eq.s32.totalorder %s21, 1
      %p93 = por %p91, %p92
      %p94 = scmp.ne.s32.totalorder %s85, %s86
      %p95 = scmp.eq.s32.totalorder %s21, 0
      %p96 = por %p94, %p95
      %p97 = scmp.ne.s32.totalorder %s85, %s86
      %p98 = scmp.eq.s32.totalorder %s22, 1
      %p99 = por %p97, %p98
      %p101 = scmp.ne.s32.totalorder %s86, %s100
      %p102 = scmp.eq.s32.totalorder %s22, 0
      %p103 = por %p101, %p102
      %s104 = ssub.s32 %s23, %s35
      %s105 = ssub.s32 %s24, %s31
      %s106 = sor.u32 %s104, %s105
      %p107 = scmp.eq.s32.totalorder %s106, 0
      %s109 = sadd.s32 %s108, 1
      %s110 = scalar_select %p107, %s108, %s109
      %p113 = pneg %p107
      %p114 = scmp.eq.s32.totalorder %s16, 1
      %p115 = por %p113, %p114
      %p116 = scmp.ne.s32.totalorder %s108, %s111
      %p117 = scmp.eq.s32.totalorder %s16, 0
      %p118 = por %p116, %p117
      %p119 = scmp.ne.s32.totalorder %s108, %s111
      %p120 = scmp.eq.s32.totalorder %s21, 1
      %p121 = por %p119, %p120
      %p122 = scmp.ne.s32.totalorder %s111, %s112
      %p123 = scmp.eq.s32.totalorder %s21, 0
      %p124 = por %p122, %p123
      %p125 = scmp.ne.s32.totalorder %s111, %s112
      %p126 = scmp.eq.s32.totalorder %s22, 1
      %p127 = por %p125, %p126
      %p129 = scmp.ne.s32.totalorder %s112, %s128
      %p130 = scmp.eq.s32.totalorder %s22, 0
      %p131 = por %p129, %p130
      %s132 = ssub.s32 %s23, %s35
      %s133 = ssub.s32 %s24, %s31
      %s134 = sor.u32 %s132, %s133
      %p135 = scmp.eq.s32.totalorder %s134, 0
      %s137 = sadd.s32 %s136, 1
      %s138 = scalar_select %p135, %s136, %s137
      %p141 = pneg %p135
      %p142 = scmp.eq.s32.totalorder %s16, 1
      %p143 = por %p141, %p142
      %p144 = scmp.ne.s32.totalorder %s136, %s139
      %p145 = scmp.eq.s32.totalorder %s16, 0
      %p146 = por %p144, %p145
      %p147 = scmp.ne.s32.totalorder %s136, %s139
      %p148 = scmp.eq.s32.totalorder %s21, 1
      %p149 = por %p147, %p148
      %p150 = scmp.ne.s32.totalorder %s139, %s140
      %p151 = scmp.eq.s32.totalorder %s21, 0
      %p152 = por %p150, %p151
      %p153 = scmp.ne.s32.totalorder %s139, %s140
      %p154 = scmp.eq.s32.totalorder %s22, 1
      %p155 = por %p153, %p154
      %p157 = scmp.ne.s32.totalorder %s140, %s156
      %p158 = scmp.eq.s32.totalorder %s22, 0
      %p159 = por %p157, %p158
      %p160 = scmp.le.s32.totalorder 1, %s16
      %p161 = scmp.lt.s32.totalorder %s16, 3
      %p162 = pnand %p160, %p161
      %p163 = pneg %p162
      // Predicated region
      $region9: #{tpu_custom_call.1} parent=5 // pred_check
        _
      $region10: #{tpu_custom_call.1} parent=5 // pred_check_branch
        %165 = sbr.rel (%p162) target = $region12
      $region11: #{tpu_custom_call.1} parent=5 // pred_region
        %s166 = ssub.s32 %s16, 1
        // Predicated region
        $region13: #{tpu_custom_call.1} parent=11 // pred_check
          %p167 = pneg %p75
        $region14: #{tpu_custom_call.1} parent=11 // pred_check_branch
          %169 = sbr.rel (%p167) target = $region16
        $region15: #{tpu_custom_call.1} parent=11 // pred_region
          _
        $region16: #{tpu_custom_call.1} parent=11 // pred_fallthru
          _
        // Predicated region
        $region17: #{tpu_custom_call.1} parent=11 // pred_check
          %p170 = pneg %p96
        $region18: #{tpu_custom_call.1} parent=11 // pred_check_branch
          %172 = sbr.rel (%p170) target = $region20
        $region19: #{tpu_custom_call.1} parent=11 // pred_region
          _
        $region20: #{tpu_custom_call.1} parent=11 // pred_fallthru
          _
      $region12: #{tpu_custom_call.1} parent=5 // pred_fallthru
        _
      %p173 = scmp.lt.s32.totalorder %s16, 2
      // Predicated region
      $region21: #{tpu_custom_call.1} parent=5 // pred_check
        %p174 = pneg %p173
      $region22: #{tpu_custom_call.1} parent=5 // pred_check_branch
        %176 = sbr.rel (%p174) target = $region24
      $region23: #{tpu_custom_call.1} parent=5 // pred_region
        // Predicated region
        $region25: #{tpu_custom_call.1} parent=23 // pred_check
          %p177 = pneg %p48
        $region26: #{tpu_custom_call.1} parent=23 // pred_check_branch
          %179 = sbr.rel (%p177) target = $region28
        $region27: #{tpu_custom_call.1} parent=23 // pred_region
          %p180 = scmp.lt.s32.totalorder %s23, 1
          %s181 = scalar_select %p180, %s23, 1
          %s182 = scalar_lea.vmem %s0, %s181
        $region28: #{tpu_custom_call.1} parent=23 // pred_fallthru
          _
        // Predicated region
        $region29: #{tpu_custom_call.1} parent=23 // pred_check
          %p183 = pneg %p118
        $region30: #{tpu_custom_call.1} parent=23 // pred_check_branch
          %185 = sbr.rel (%p183) target = $region32
        $region31: #{tpu_custom_call.1} parent=23 // pred_region
          %s186 = sand.u32 %s108, 1
          %s187 = scalar_lea.sflag [#allocation3], %s186
          %s188 = sand.u32 %s108, 1
          %s189 = smul.addr %s188, 64
          %s190 = scalar_lea.vmem [#allocation2], %s189
          %s191 = smul.u32 2, %s24
          %s193 = ssub.s32 1024, 1024
          %194 = vsyncadd %s187, %s193
          %s195 = smul.addr %s23, 8
          %s196 = sadd.s32 %s191, %s195
          %s197 = smul.addr %s196, 128
          %s198 = scalar_lea.hbm %s3, %s197
          %s199 = sshll.u32 %s190, 4
          %s200 = int_to_ptr.vmem [resolvable:$true] %s199
          %205 = dma.hbm_to_vmem [thread:$0]  %s198, 1024, %s200, %s187, 256, 256, 16
        $region32: #{tpu_custom_call.1} parent=23 // pred_fallthru
          _
      $region24: #{tpu_custom_call.1} parent=5 // pred_fallthru
        _
      %p206 = scmp.le.s32.totalorder 1, %s16
      %p207 = scmp.lt.s32.totalorder %s16, 3
      %p208 = pnand %p206, %p207
      %p209 = pneg %p208
      // Predicated region
      $region33: #{tpu_custom_call.1} parent=5 // pred_check
        _
      $region34: #{tpu_custom_call.1} parent=5 // pred_check_branch
        %211 = sbr.rel (%p208) target = $region36
      $region35: #{tpu_custom_call.1} parent=5 // pred_region
        %s212 = ssub.s32 %s16, 1
        %s213 = sand.u32 %s111, 1
        %s214 = scalar_lea.sflag [#allocation3], %s213
        %s215 = sand.u32 %s111, 1
        %s216 = smul.addr %s215, 64
        %s217 = scalar_lea.vmem [#allocation2], %s216
        // Predicated region
        $region37: #{tpu_custom_call.1} parent=35 // pred_check
          %p218 = pneg %p124
        $region38: #{tpu_custom_call.1} parent=35 // pred_check_branch
          %220 = sbr.rel (%p218) target = $region40
        $region39: #{tpu_custom_call.1} parent=35 // pred_region
          %221 = dma.done %s214, 1024
        $region40: #{tpu_custom_call.1} parent=35 // pred_fallthru
          _
        %p222 = scmp.lt.s32.totalorder %s25, 1
        %s223 = scalar_select %p222, %s25, 1
        %s224 = scalar_lea.vmem %s0, %s223
        %p225 = pneg %p54
        %p226 = pneg %p51
        %p227 = pneg %p75
        %p228 = pneg %p72
        %p229 = pneg %p96
        %p230 = pneg %p93
        %s231 = sand.u32 %s111, 1
        %s232 = scalar_lea.sflag [#allocation3], %s231
        %s233 = sand.u32 %s111, 1
        %s234 = smul.addr %s233, 64
        %s235 = scalar_lea.vmem [#allocation2], %s234
        %p236 = pneg %p124
        %p237 = pneg %p121
        %p238 = pneg %p152
        %p239 = pneg %p149
        %s240 = sand.u32 %s139, 1
        %s241 = scalar_lea.sflag [#allocation4], %s240
        %s242 = sand.u32 %s139, 1
        %s243 = smul.addr %s242, 64
        %s244 = scalar_lea.vmem [#allocation5], %s243
        %p245 = scmp.lt.s32.totalorder %s25, 1
        %s246 = scalar_select %p245, %s25, 1
        %s247 = scalar_lea.vmem %s0, %s246
        %s248 = smul.u32 2, %s26
        %s249 = smul.u32 2, %s26
        %v250 = vld [vmem:[%s247] sm:$0x1]
        %v251 = vld [vmem:[%s1] sm:$0xff]
        %v252 = vld [vmem:[%s1 + $0x8] sm:$0xff]
        %v253 = vld [vmem:[%s1 + $0x10] sm:$0xff]
        %v254 = vld [vmem:[%s1 + $0x18] sm:$0xff]
        %v256 = vlaneseq
        %v257 = vshrl.u32 %v256, 7
        %v258 = vsub.s32 0, %v257
        %v259 = vrot.slane %v250, %v258
        %v261 = vmul.f32 %v259, %v251
        %v262 = vmul.f32 %v259, %v252
        %v263 = vmul.f32 %v259, %v253
        %v264 = vmul.f32 %v259, %v254
        %vm265 = vcmask 392192
        %v266 = vsel %vm265, %v261, 0.0
        %267 = vadd.xlane.f32.xlu0 %v266
        %v268 = vpop.xlane.xlu0 %267
        %v269 = vsel %vm265, %v262, 0.0
        %270 = vadd.xlane.f32.xlu0 %v269
        %v271 = vpop.xlane.xlu0 %270
        %v272 = vsel %vm265, %v263, 0.0
        %273 = vadd.xlane.f32.xlu0 %v272
        %v274 = vpop.xlane.xlu0 %273
        %v275 = vsel %vm265, %v264, 0.0
        %276 = vadd.xlane.f32.xlu0 %v275
        %v277 = vpop.xlane.xlu0 %276
        %v278 = vld [vmem:[%s2] sm:$0xff]
        %v279 = vld [vmem:[%s2 + $0x8] sm:$0xff]
        %v280 = vld [vmem:[%s2 + $0x10] sm:$0xff]
        %v281 = vld [vmem:[%s2 + $0x18] sm:$0xff]
        %v282 = vadd.f32 %v268, %v278
        %v283 = vadd.f32 %v271, %v279
        %v284 = vadd.f32 %v274, %v280
        %v285 = vadd.f32 %v277, %v281
        %vm286 = vcmask 7168
        %v287 = vsel %vm286, %v282, 0.0
        %v288 = vsel %vm286, %v283, 0.0
        %v289 = vadd.f32 %v287, %v288
        %v290 = vsel %vm286, %v284, 0.0
        %v291 = vadd.f32 %v289, %v290
        %v292 = vsel %vm286, %v285, 0.0
        %v293 = vadd.f32 %v291, %v292
        %v294 = vrot.slane %v293, 4
        %v295 = vadd.f32 %v293, %v294
        %v296 = vrot.slane %v295, 2
        %v297 = vadd.f32 %v295, %v296
        %v298 = vrot.slane %v297, 1
        %v299 = vadd.f32 %v297, %v298
        %v300 = vrcp.pop 32.0
        %v301 = vmul.f32 %v299, %v300
        %v302 = vsub.f32 %v282, %v301
        %v303 = vsub.f32 %v283, %v301
        %v304 = vsub.f32 %v284, %v301
        %v305 = vsub.f32 %v285, %v301
        %v306 = vmul.f32 %v302, %v302
        %v307 = vmul.f32 %v303, %v303
        %v308 = vmul.f32 %v304, %v304
        %v309 = vmul.f32 %v305, %v305
        %v310 = vsel %vm286, %v306, 0.0
        %v311 = vsel %vm286, %v307, 0.0
        %v312 = vadd.f32 %v310, %v311
        %v313 = vsel %vm286, %v308, 0.0
        %v314 = vadd.f32 %v312, %v313
        %v315 = vsel %vm286, %v309, 0.0
        %v316 = vadd.f32 %v314, %v315
        %v317 = vrot.slane %v316, 4
        %v318 = vadd.f32 %v316, %v317
        %v319 = vrot.slane %v318, 2
        %v320 = vadd.f32 %v318, %v319
        %v321 = vrot.slane %v320, 1
        %v322 = vadd.f32 %v320, %v321
        %v323 = vmul.f32 %v322, %v300
        %v324 = vadd.f32 %v323, 1e-05
        %v325 = vrsqrt.pop %v324
        %v326 = vmul.f32 %v302, %v325
        %v327 = vmul.f32 %v303, %v325
        %v328 = vmul.f32 %v304, %v325
        %v329 = vmul.f32 %v305, %v325
        %s330 = scalar_lea.vmem %s2, 32
        %v331 = vld [vmem:[%s330] sm:$0xff]
        %v332 = vld [vmem:[%s330 + $0x8] sm:$0xff]
        %v333 = vld [vmem:[%s330 + $0x10] sm:$0xff]
        %v334 = vld [vmem:[%s330 + $0x18] sm:$0xff]
        %v335 = vmul.f32 %v326, %v331
        %v336 = vmul.f32 %v327, %v332
        %v337 = vmul.f32 %v328, %v333
        %v338 = vmul.f32 %v329, %v334
        %s339 = scalar_lea.vmem %s2, 64
        %v340 = vld [vmem:[%s339] sm:$0xff]
        %v341 = vld [vmem:[%s339 + $0x8] sm:$0xff]
        %v342 = vld [vmem:[%s339 + $0x10] sm:$0xff]
        %v343 = vld [vmem:[%s339 + $0x18] sm:$0xff]
        %v344 = vadd.f32 %v335, %v340
        %v345 = vadd.f32 %v336, %v341
        %v346 = vadd.f32 %v337, %v342
        %v347 = vadd.f32 %v338, %v343
        %v348 = vld [vmem:[%s217] sm:$0xff]
        %v349 = vld [vmem:[%s217 + $0x8] sm:$0xff]
        %v350 = vld [vmem:[%s217 + $0x10] sm:$0xff]
        %v351 = vld [vmem:[%s217 + $0x18] sm:$0xff]
        %v352 = vld [vmem:[%s217 + $0x20] sm:$0xff]
        %v353 = vld [vmem:[%s217 + $0x28] sm:$0xff]
        %v354 = vld [vmem:[%s217 + $0x30] sm:$0xff]
        %v355 = vld [vmem:[%s217 + $0x38] sm:$0xff]
        %357 = vset.pattern.permute.xlu0 0
        %358 = vperm.xlu0 %357, %v344
        %v359 = vpop.permute.xlu0 %358
        %362 = vset.pattern.permute.xlu0 0
        %363 = vperm.xlu0 %362, %v345
        %v364 = vpop.permute.xlu0 %363
        %367 = vset.pattern.permute.xlu0 0
        %368 = vperm.xlu0 %367, %v346
        %v369 = vpop.permute.xlu0 %368
        %372 = vset.pattern.permute.xlu0 0
        %373 = vperm.xlu0 %372, %v347
        %v374 = vpop.permute.xlu0 %373
        %v376 = vmul.f32 %v348, %v359
        %v377 = vmul.f32 %v349, %v359
        %v378 = vmul.f32 %v350, %v364
        %v379 = vmul.f32 %v351, %v364
        %v380 = vmul.f32 %v352, %v369
        %v381 = vmul.f32 %v353, %v369
        %v382 = vmul.f32 %v354, %v374
        %v383 = vmul.f32 %v355, %v374
        %384 = vst [vmem:[%s244] sm:$0xff] %v376
        %385 = vst [vmem:[%s244 + $0x8] sm:$0xff] %v377
        %386 = vst [vmem:[%s244 + $0x10] sm:$0xff] %v378
        %387 = vst [vmem:[%s244 + $0x18] sm:$0xff] %v379
        %388 = vst [vmem:[%s244 + $0x20] sm:$0xff] %v380
        %389 = vst [vmem:[%s244 + $0x28] sm:$0xff] %v381
        %390 = vst [vmem:[%s244 + $0x30] sm:$0xff] %v382
        %391 = vst [vmem:[%s244 + $0x38] sm:$0xff] %v383
        %s392 = sand.u32 %s139, 1
        %s393 = scalar_lea.sflag [#allocation4], %s392
        %s394 = sand.u32 %s139, 1
        %s395 = smul.addr %s394, 64
        %s396 = scalar_lea.vmem [#allocation5], %s395
        // Predicated region
        $region41: #{tpu_custom_call.1} parent=35 // pred_check
          %p397 = pneg %p149
        $region42: #{tpu_custom_call.1} parent=35 // pred_check_branch
          %399 = sbr.rel (%p397) target = $region44
        $region43: #{tpu_custom_call.1} parent=35 // pred_region
          %s400 = smul.u32 2, %s26
          %s402 = ssub.s32 1024, 1024
          %403 = vsyncadd %s393, %s402
          %s404 = smul.addr %s25, 8
          %s405 = sadd.s32 %s400, %s404
          %s406 = smul.addr %s405, 128
          %s407 = scalar_lea.hbm %s4, %s406
          %s408 = sshll.u32 %s396, 4
          %s409 = int_to_ptr.vmem [resolvable:$true] %s408
          %414 = dma.vmem_to_hbm [thread:$0]  %s409, 1024, %s407, %s393, 256, 256, 16
        $region44: #{tpu_custom_call.1} parent=35 // pred_fallthru
          _
      $region36: #{tpu_custom_call.1} parent=5 // pred_fallthru
        _
      %p415 = scmp.le.s32.totalorder 2, %s16
      // Predicated region
      $region45: #{tpu_custom_call.1} parent=5 // pred_check
        %p416 = pneg %p415
      $region46: #{tpu_custom_call.1} parent=5 // pred_check_branch
        %418 = sbr.rel (%p416) target = $region48
      $region47: #{tpu_custom_call.1} parent=5 // pred_region
        %s419 = ssub.s32 %s16, 2
        // Predicated region
        $region49: #{tpu_custom_call.1} parent=47 // pred_check
          %p420 = pneg %p155
        $region50: #{tpu_custom_call.1} parent=47 // pred_check_branch
          %422 = sbr.rel (%p420) target = $region52
        $region51: #{tpu_custom_call.1} parent=47 // pred_region
          %s423 = sand.u32 %s140, 1
          %s424 = scalar_lea.sflag [#allocation4], %s423
          %s425 = sand.u32 %s140, 1
          %s426 = smul.addr %s425, 64
          %s427 = scalar_lea.vmem [#allocation5], %s426
          %428 = dma.done %s424, 1024
        $region52: #{tpu_custom_call.1} parent=47 // pred_fallthru
          _
      $region48: #{tpu_custom_call.1} parent=5 // pred_fallthru
        _
    $region6: #{tpu_custom_call.1} parent=1 // loop_footer
      %s20 = sadd.s32 1, %s16
    $region7: #{tpu_custom_call.1} parent=1 // loop_footer_branch
      %15 = sbr.rel target = $region3
    $region8: #{tpu_custom_call.1} parent=1 // loop_exit
      _
    %429 = vsyncpa [#allocation3], 1
    %s430 = scalar_lea.sflag [#allocation3], 1
    %431 = vsyncpa %s430, 1
    %432 = vsyncpa [#allocation4], 1
    %s433 = scalar_lea.sflag [#allocation4], 1
    %434 = vsyncpa %s433, 1

</llo_original>
